<compile_context>
chip_gen: v6e
topology: v6e:2x2x1
jax: 0.10.0
libtpu: 0.0.40
codegen_flags: <defaults>
</compile_context>

<pallas_src>
import math
import functools

import jax
import jax.numpy as jnp
from jax.experimental import pallas as pl
from jax.experimental.pallas import tpu as pltpu


_VMEM_TILE_BUDGET = 24 << 20  # keep well under v7x's 32 MiB scoped default


def _round_up(x, m):
    return ((x + m - 1) // m) * m


def _sinusoidal_pe(S, F):
    """Standard sinusoidal positional table (S, F), f32, odd F handled."""
    position = jnp.arange(S, dtype=jnp.float32)[:, None]
    div_term = jnp.exp(jnp.arange(0, F, 2, dtype=jnp.float32)
                       * (-(math.log(10000.0) / F)))
    pe = jnp.zeros((S, F), dtype=jnp.float32)
    pe = pe.at[:, 0::2].set(jnp.sin(position * div_term))
    pe = pe.at[:, 1::2].set(jnp.cos(position * div_term[: F // 2]))
    return pe


def _carbon_kernel(wv_ref, ww_ref, posb_ref, gamma_ref, beta_ref, o_ref, *,
                   eps, h_real):
    # Word path: bf16 x bf16 -> f32 accumulation on the MXU.
    # leaky_relu(0.2) was already applied to the embedding table in the wrapper.
    h = jnp.dot(wv_ref[...], ww_ref[...], preferred_element_type=jnp.float32)

    # Positional projection + both linear biases were folded into posb (f32).
    h = h + posb_ref[...]                              # (tile_seq, H_pad) f32

    # LayerNormalization (LeafNATS): a_2 * (x - mean) / (std + eps) + b_2
    # PyTorch .std() is unbiased (ddof=1); eps is added to std (not variance).
    # Padded H columns of h are exactly zero (zero-padded ww columns / posb),
    # so plain sums over the padded axis equal sums over the real h_real cols.
    mean = jnp.sum(h, axis=-1, keepdims=True) * (1.0 / h_real)
    centered = h - mean
    if h.shape[-1] != h_real:
        # Mask padded columns so they do not pollute the variance.
        col = jax.lax.broadcasted_iota(jnp.int32, h.shape, dimension=1)
        centered = jnp.where(col < h_real, centered, 0.0)
    var_unbiased = jnp.sum(centered * centered, axis=-1, keepdims=True) \
        * (1.0 / (h_real - 1))
    inv = pl.reciprocal(jnp.sqrt(var_unbiased) + eps, approx=True)
    o_ref[...] = (gamma_ref[...] * (centered * inv) + beta_ref[...]).astype(o_ref.dtype)


def carbon_embeddings_forward(input_tokens, params, *, tile_seq=512, eps=1e-6,
                              out_dtype=jnp.float32):
    """input_tokens: int32 (B, S).  Returns (B, S, hidden_size) in out_dtype."""
    emb_table = params["word_embeddings"]                           # (V, F)
    ww, bw = params["word_trans_w"], params["word_trans_b"]         # (F,H), (H,)
    wp, bp = params["position_trans_w"], params["position_trans_b"] # (F,H), (H,)
    gamma, beta = params["norm_gamma"], params["norm_beta"]         # (H,), (H,)

    B, S = input_tokens.shape
    V, F = emb_table.shape
    H = ww.shape[1]
    assert H > 1, "hidden_size must be > 1 (unbiased std uses H-1)"

    # --- glue (plain JAX) ----------------------------------------------------
    # leaky_relu commutes with the row gather -> activate the table ONCE and
    # gather already-activated bf16 rows (no per-token VPU pass in the kernel;
    # on v5e a bf16 compare/select would otherwise be widened to f32).
    # TODO(synk): the data-dependent embedding gather stays an XLA gather; when
    # F > H (or the weights are reused across many steps) precompute
    # proj_table = leaky_relu(emb) @ ww + bw as a (V, H) table and drop the
    # in-kernel matmul.  For factorized embeddings (F < H, this module's point)
    # the (ts, F) bf16 stream + in-kernel MXU is the lower-HBM-traffic choice.
    table_act = jnp.where(emb_table >= 0, emb_table, 0.2 * emb_table)
    word_vec = jnp.take(table_act.astype(jnp.bfloat16), input_tokens, axis=0)  # (B,S,F)

    # Batch-invariant positional projection (tiny: S x H), fold in both biases.
    pe = _sinusoidal_pe(S, F)
    pe = jnp.where(pe >= 0, pe, 0.2 * pe)
    pos_add = pe @ wp + bp + bw                                     # (S, H) f32

    # --- lane-dense H: zero-pad projection columns to a multiple of 128 ------
    H_pad = _round_up(H, 128)
    ww_bf = ww.astype(jnp.bfloat16)
    if H_pad != H:
        ww_bf = jnp.pad(ww_bf, ((0, 0), (0, H_pad - H)))
        pos_add = jnp.pad(pos_add, ((0, 0), (0, H_pad - H)))
        gamma_p = jnp.pad(gamma, (0, H_pad - H))
        beta_p = jnp.pad(beta, (0, H_pad - H))
    else:
        gamma_p, beta_p = gamma, beta
    gamma2 = gamma_p.reshape(1, H_pad)
    beta2 = beta_p.reshape(1, H_pad)

    # --- sequence tiling under an explicit VMEM budget (v7x-safe) ------------
    out_itemsize = jnp.dtype(out_dtype).itemsize

    def _vmem_bytes(ts_):
        return (2 * ts_ * F * 2                    # word tile (bf16), dbl-buffered
                + 2 * ts_ * H_pad * 4              # pos tile (f32), dbl-buffered
                + 2 * ts_ * H_pad * out_itemsize   # out tile, dbl-buffered
                + 2 * F * H_pad * 2                # resident weight (worst case)
                + 2 * 2 * H_pad * 4)               # gamma/beta

    ts = max(8, _round_up(min(tile_seq, _round_up(S, 8)), 8))
    while ts > 8 and _vmem_bytes(ts) > _VMEM_TILE_BUDGET:
        ts = max(8, _round_up(ts // 2, 8))
    S_pad = _round_up(S, ts)

    if S_pad != S:
        word_vec = jnp.pad(word_vec, ((0, 0), (0, S_pad - S), (0, 0)))
        pos_add = jnp.pad(pos_add, ((0, S_pad - S), (0, 0)))

    # Batch innermost: pos_add's block index (s, 0) is constant across the
    # inner b steps, so its re-DMA is elided; ww/gamma/beta stay resident.
    grid = (S_pad // ts, B)

    # Resident weight: single-buffer once it is large enough to matter for
    # VMEM (v7x 64 MiB); double-buffering a never-changing block is dead VMEM.
    ww_spec_kwargs = {}
    if F * H_pad * 2 >= (1 << 20):
        ww_spec_kwargs["pipeline_mode"] = pl.Buffered(1)
    ww_spec = pl.BlockSpec((F, H_pad), lambda s, b: (0, 0), **ww_spec_kwargs)

    kernel = functools.partial(_carbon_kernel, eps=eps, h_real=H)

    cost = pl.CostEstimate(
        flops=2 * B * S_pad * F * H_pad,
        transcendentals=B * S_pad,  # one sqrt + reciprocal per row
        bytes_accessed=(B * S_pad * F * 2 + F * H_pad * 2 + S_pad * H_pad * 4
                        + 2 * H_pad * 4 + B * S_pad * H_pad * out_itemsize))

    out = pl.pallas_call(
        kernel,
        out_shape=jax.ShapeDtypeStruct((B, S_pad, H_pad), out_dtype),
        grid_spec=pltpu.PrefetchScalarGridSpec(
            num_scalar_prefetch=0,
            grid=grid,
            in_specs=[
                # word-embedding tile (batch dim squeezed) -> kernel sees (ts, F)
                pl.BlockSpec((None, ts, F), lambda s, b: (b, s, 0)),
                # word projection weight, resident across the grid (bf16)
                ww_spec,
                # positional projection (+ biases): indexed by seq only;
                # constant over the inner batch axis -> re-DMA elided.
                pl.BlockSpec((ts, H_pad), lambda s, b: (s, 0)),
                pl.BlockSpec((1, H_pad), lambda s, b: (0, 0)),   # norm gamma
                pl.BlockSpec((1, H_pad), lambda s, b: (0, 0)),   # norm beta
            ],
            out_specs=pl.BlockSpec((None, ts, H_pad), lambda s, b: (b, s, 0)),
        ),
        compiler_params=pltpu.CompilerParams(
            # Both grid axes are independent -> megacore (v7x) can split either.
            dimension_semantics=("parallel", "parallel"),
            vmem_limit_bytes=int(min(48 << 20, max(32 << 20, 2 * _vmem_bytes(ts)))),
        ),
        cost_estimate=cost,
    )(word_vec, ww_bf, pos_add, gamma2, beta2)

    if S_pad != S or H_pad != H:
        out = out[:, :S, :H]
    return out


def init_params(key, vocab_size, hidden_size, factor_size):
    k0, k1, k2, k3, k4 = jax.random.split(key, 5)
    lin_bound = 1.0 / math.sqrt(factor_size)
    return {
        "word_embeddings": jax.random.normal(k0, (vocab_size, factor_size),
                                             dtype=jnp.float32),
        "word_trans_w": jax.random.uniform(k1, (factor_size, hidden_size),
                                           minval=-lin_bound, maxval=lin_bound,
                                           dtype=jnp.float32),
        "word_trans_b": jax.random.uniform(k2, (hidden_size,),
                                           minval=-lin_bound, maxval=lin_bound,
                                           dtype=jnp.float32),
        "position_trans_w": jax.random.uniform(k3, (factor_size, hidden_size),
                                               minval=-lin_bound, maxval=lin_bound,
                                               dtype=jnp.float32),
        "position_trans_b": jax.random.uniform(k4, (hidden_size,),
                                               minval=-lin_bound, maxval=lin_bound,
                                               dtype=jnp.float32),
        "norm_gamma": jnp.ones((hidden_size,), dtype=jnp.float32),
        "norm_beta": jnp.zeros((hidden_size,), dtype=jnp.float32),
    }


def _reference_forward(input_tokens, params, eps=1e-6):
    """Pure-JAX reference using the same bf16 matmul operands as the kernel."""
    emb = params["word_embeddings"]
    ww, bw = params["word_trans_w"], params["word_trans_b"]
    wp, bp = params["position_trans_w"], params["position_trans_b"]
    gamma, beta = params["norm_gamma"], params["norm_beta"]
    B, S = input_tokens.shape
    V, F = emb.shape
    H = ww.shape[1]

    table = jnp.where(emb >= 0, emb, 0.2 * emb).astype(jnp.bfloat16)
    wv = jnp.take(table, input_tokens, axis=0)
    word = jnp.dot(wv.reshape(B * S, F), ww.astype(jnp.bfloat16),
                   preferred_element_type=jnp.float32).reshape(B, S, H)

    pe = _sinusoidal_pe(S, F)
    pe = jnp.where(pe >= 0, pe, 0.2 * pe)
    pos = pe @ wp + bp + bw

    h = word + pos[None, :, :]
    mean = jnp.mean(h, axis=-1, keepdims=True)
    c = h - mean
    std = jnp.sqrt(jnp.sum(c * c, axis=-1, keepdims=True) / (H - 1))
    return gamma * c / (std + eps) + beta


if __name__ == "__main__":
    vocab_size, hidden_size, factor_size = 32, 32, 16
    B, S = 2, 8

    key = jax.random.PRNGKey(0)
    kp, kt = jax.random.split(key)
    params = init_params(kp, vocab_size, hidden_size, factor_size)
    input_tokens = jax.random.randint(kt, (B, S), 0, vocab_size, dtype=jnp.int32)

    out = carbon_embeddings_forward(input_tokens, params)
    jax.block_until_ready(out)
    assert out.shape == (B, S, hidden_size)
    assert bool(jnp.all(jnp.isfinite(out)))

    ref = _reference_forward(input_tokens, params)
    assert bool(jnp.allclose(out, ref, atol=5e-3, rtol=5e-3)), "mismatch vs reference"

    print("KERNEL_OK")
</pallas_src>

<mosaic_0001>
module attributes {stable_mosaic.version = 11 : i64} {
  func.func @_carbon_kernel(%arg0: i32, %arg1: i32, %arg2: memref<1x8x16xbf16, #tpu.memory_space<vmem>>, %arg3: memref<16x128xbf16, #tpu.memory_space<vmem>>, %arg4: memref<8x128xf32, #tpu.memory_space<vmem>>, %arg5: memref<1x128xf32, #tpu.memory_space<vmem>>, %arg6: memref<1x128xf32, #tpu.memory_space<vmem>>, %arg7: memref<1x8x128xf32, #tpu.memory_space<vmem>>) attributes {dimension_semantics = [#tpu.dimension_semantics<parallel>, #tpu.dimension_semantics<parallel>], iteration_bounds = array<i64: 1, 2>, scalar_prefetch = 0 : i64, scratch_operands = 0 : i64, tpu.core_type = #tpu.core_type<tc>, window_params = [{transform_indices = @transform_0, window_bounds = array<i64: 1, 8, 16>}, {pipeline_mode = #tpu.pipeline_mode<synchronous>, transform_indices = @transform_1, window_bounds = array<i64: 16, 128>}, {transform_indices = @transform_2, window_bounds = array<i64: 8, 128>}, {pipeline_mode = #tpu.pipeline_mode<synchronous>, transform_indices = @transform_3, window_bounds = array<i64: 1, 128>}, {pipeline_mode = #tpu.pipeline_mode<synchronous>, transform_indices = @transform_4, window_bounds = array<i64: 1, 128>}, {transform_indices = @transform_5, window_bounds = array<i64: 1, 8, 128>}]} {
    %c0 = arith.constant 0 : index
    %c0_0 = arith.constant 0 : index
    %c0_1 = arith.constant 0 : index
    %0 = vector.load %arg2[%c0, %c0_0, %c0_1] : memref<1x8x16xbf16, #tpu.memory_space<vmem>>, vector<1x8x16xbf16>
    %1 = vector.shape_cast %0 : vector<1x8x16xbf16> to vector<8x16xbf16>
    %c0_2 = arith.constant 0 : index
    %c0_3 = arith.constant 0 : index
    %2 = vector.load %arg3[%c0_2, %c0_3] : memref<16x128xbf16, #tpu.memory_space<vmem>>, vector<16x128xbf16>
    %cst = arith.constant dense<0.000000e+00> : vector<8x128xf32>
    %3 = tpu.matmul %1, %2, %cst {dimension_numbers = #tpu.dot_dimension_numbers<[1], [0], [0], [1], [0, 0, 1, 1], [], []>} : vector<8x16xbf16>, vector<16x128xbf16>, vector<8x128xf32> -> vector<8x128xf32>
    %c0_4 = arith.constant 0 : index
    %c0_5 = arith.constant 0 : index
    %4 = vector.load %arg4[%c0_4, %c0_5] : memref<8x128xf32, #tpu.memory_space<vmem>>, vector<8x128xf32>
    %5 = arith.addf %3, %4 : vector<8x128xf32>
    %cst_6 = arith.constant dense<0.000000e+00> : vector<8xf32>
    %6 = vector.multi_reduction <add>, %5, %cst_6 [1] : vector<8x128xf32> to vector<8xf32>
    %7 = vector.shape_cast %6 : vector<8xf32> to vector<8x1xf32>
    %cst_7 = arith.constant 3.125000e-02 : f32
    %8 = vector.broadcast %cst_7 : f32 to vector<8x1xf32>
    %9 = arith.mulf %7, %8 : vector<8x1xf32>
    %10 = vector.broadcast %9 : vector<8x1xf32> to vector<8x128xf32>
    %11 = arith.subf %5, %10 : vector<8x128xf32>
    %12 = tpu.iota {dimensions = array<i32: 1>} : vector<8x128xi32>
    %c32_i32 = arith.constant 32 : i32
    %13 = vector.broadcast %c32_i32 : i32 to vector<8x128xi32>
    %14 = arith.cmpi slt, %12, %13 : vector<8x128xi32>
    %cst_8 = arith.constant 0.000000e+00 : f32
    %15 = vector.broadcast %cst_8 : f32 to vector<8x128xf32>
    %16 = arith.select %14, %11, %15 : vector<8x128xi1>, vector<8x128xf32>
    %17 = arith.mulf %16, %16 : vector<8x128xf32>
    %cst_9 = arith.constant dense<0.000000e+00> : vector<8xf32>
    %18 = vector.multi_reduction <add>, %17, %cst_9 [1] : vector<8x128xf32> to vector<8xf32>
    %19 = vector.shape_cast %18 : vector<8xf32> to vector<8x1xf32>
    %cst_10 = arith.constant 0.0322580636 : f32
    %20 = vector.broadcast %cst_10 : f32 to vector<8x1xf32>
    %21 = arith.mulf %19, %20 : vector<8x1xf32>
    %22 = math.sqrt %21 : vector<8x1xf32>
    %cst_11 = arith.constant 9.99999997E-7 : f32
    %23 = vector.broadcast %cst_11 : f32 to vector<8x1xf32>
    %24 = arith.addf %22, %23 : vector<8x1xf32>
    %25 = tpu.reciprocal %24 {approx = true} : vector<8x1xf32> -> vector<8x1xf32>
    %c0_12 = arith.constant 0 : index
    %c0_13 = arith.constant 0 : index
    %26 = vector.load %arg5[%c0_12, %c0_13] : memref<1x128xf32, #tpu.memory_space<vmem>>, vector<1x128xf32>
    %27 = vector.broadcast %25 : vector<8x1xf32> to vector<8x128xf32>
    %28 = arith.mulf %16, %27 : vector<8x128xf32>
    %29 = vector.broadcast %26 : vector<1x128xf32> to vector<8x128xf32>
    %30 = arith.mulf %29, %28 : vector<8x128xf32>
    %c0_14 = arith.constant 0 : index
    %c0_15 = arith.constant 0 : index
    %31 = vector.load %arg6[%c0_14, %c0_15] : memref<1x128xf32, #tpu.memory_space<vmem>>, vector<1x128xf32>
    %32 = vector.broadcast %31 : vector<1x128xf32> to vector<8x128xf32>
    %33 = arith.addf %30, %32 : vector<8x128xf32>
    %c0_16 = arith.constant 0 : index
    %c0_17 = arith.constant 0 : index
    %c0_18 = arith.constant 0 : index
    %34 = vector.load %arg7[%c0_16, %c0_17, %c0_18] : memref<1x8x128xf32, #tpu.memory_space<vmem>>, vector<1x8x128xf32>
    %35 = vector.shape_cast %34 : vector<1x8x128xf32> to vector<8x128xf32>
    %36 = vector.shape_cast %33 : vector<8x128xf32> to vector<1x8x128xf32>
    tpu.vector_store %arg7[%c0_16, %c0_17, %c0_18], %36 {strides = array<i32>} : memref<1x8x128xf32, #tpu.memory_space<vmem>>, vector<1x8x128xf32>,
    return
  }
  func.func @transform_0(%arg0: i32, %arg1: i32) -> (i32, i32, i32) {
    %c0_i32 = arith.constant 0 : i32
    %c0_i32_0 = arith.constant 0 : i32
    return %arg1, %arg0, %c0_i32 : i32, i32, i32
  }
  func.func @transform_1(%arg0: i32, %arg1: i32) -> (i32, i32) {
    %c0_i32 = arith.constant 0 : i32
    %c0_i32_0 = arith.constant 0 : i32
    %c0_i32_1 = arith.constant 0 : i32
    return %c0_i32, %c0_i32_0 : i32, i32
  }
  func.func @transform_2(%arg0: i32, %arg1: i32) -> (i32, i32) {
    %c0_i32 = arith.constant 0 : i32
    %c0_i32_0 = arith.constant 0 : i32
    return %arg0, %c0_i32 : i32, i32
  }
  func.func @transform_3(%arg0: i32, %arg1: i32) -> (i32, i32) {
    %c0_i32 = arith.constant 0 : i32
    %c0_i32_0 = arith.constant 0 : i32
    %c0_i32_1 = arith.constant 0 : i32
    return %c0_i32, %c0_i32_0 : i32, i32
  }
  func.func @transform_4(%arg0: i32, %arg1: i32) -> (i32, i32) {
    %c0_i32 = arith.constant 0 : i32
    %c0_i32_0 = arith.constant 0 : i32
    %c0_i32_1 = arith.constant 0 : i32
    return %c0_i32, %c0_i32_0 : i32, i32
  }
  func.func @transform_5(%arg0: i32, %arg1: i32) -> (i32, i32, i32) {
    %c0_i32 = arith.constant 0 : i32
    %c0_i32_0 = arith.constant 0 : i32
    return %arg1, %arg0, %c0_i32 : i32, i32, i32
  }
}

</mosaic_0001>

<llo_original>
// kernel: tpu_custom_call.1
$region0: #{tpu_custom_call.1}
  #allocation0 [shape = 'u32[]', space=smem, size = 0x4, offset = 0x4, fixed_abs, tag = 'smem constant byte address 0x4 - core index']
  #allocation1 [shape = 'u32[144,128]{1,0:T(1,128)}', space=vmem, size = 0x12000, scoped, tag = 'internal scratch']
  %s0 = inlined_call_operand.hbm [shape: bf16[2,8,16], index: 0, kind: input, shape index: {}]
  %s1 = inlined_call_operand.hbm [shape: bf16[16,128], index: 1, kind: input, shape index: {}]
  %s2 = inlined_call_operand.hbm [shape: f32[8,128], index: 2, kind: input, shape index: {}]
  %s3 = inlined_call_operand.vmem [shape: f32[1,128], index: 3, kind: input, shape index: {}]
  %s4 = inlined_call_operand.vmem [shape: f32[1,128], index: 4, kind: input, shape index: {}]
  %s5 = inlined_call_operand.hbm [shape: f32[2,8,128], index: 5, kind: output, shape index: {}]
  %s6 = sld [smem:[#allocation0]]
  $region65: #{tpu_custom_call.1} parent=0
    _
  %s8 = ssub.s32 1, %s6
  %s9 = scalar_select 0, %s8, %s6
  $region1: #{tpu_custom_call.1} parent=0
    #allocation2 [shape = 'u8[4096]{0}', space=vmem, size = 0x1000, scoped, tag = 'input window, operand 0']
    #allocation3 [shape = 's32[2]{0}', space=sflag, size = 0x8, scoped, tag = 'scoped memory for tpu_custom_call.1']
    #allocation4 [shape = 's32[2]{0}', space=sflag, size = 0x8, scoped, tag = 'scoped memory for tpu_custom_call.1']
    #allocation5 [shape = 'u8[4096]{0}', space=vmem, size = 0x1000, scoped, tag = 'input window, operand 1, single buffered']
    #allocation6 [shape = 's32[1]{0}', space=sflag, size = 0x4, scoped, tag = 'scoped memory for tpu_custom_call.1']
    #allocation7 [shape = 'u8[4096]{0}', space=vmem, size = 0x1000, scoped, tag = 'input window, operand 2, single buffered']
    #allocation8 [shape = 'u8[8192]{0}', space=vmem, size = 0x2000, scoped, tag = 'output window, operand 0']
    %10 = vsyncpa [#allocation3], 0
    %s11 = scalar_lea.sflag [#allocation3], 1
    %12 = vsyncpa %s11, 0
    %13 = vsyncpa [#allocation6], 0
    %14 = vsyncpa [#allocation4], 0
    %s15 = scalar_lea.sflag [#allocation4], 1
    %16 = vsyncpa %s15, 0
    loop: start=0, step=1, limit=4
    $region2: #{tpu_custom_call.1} parent=1 // loop_pre_header
      _
    $region3: #{tpu_custom_call.1} parent=1 // loop_header
      %s18 = sphi 0, %s22
      %p19 = scmp.ge.s32.totalorder %s18, 4
      %s25 = sphi 0, %s37
      %s26 = sphi 0, %s33
      %s27 = sphi 0, %s25
      %s28 = sphi 0, %s26
      %s29 = sphi 0, %s27
      %s30 = sphi 0, %s28
      %s42 = sphi 0, %s44
      %s45 = sphi 0, %s42
      %s46 = sphi 0, %s45
      %s62 = sphi 0, %s46
      %s66 = sphi 0, %s66
      %s68 = sphi 0, %s66
      %s69 = sphi 0, %s68
      %s83 = sphi 0, %s69
      %s89 = sphi 0, %s91
      %s92 = sphi 0, %s89
      %s93 = sphi 0, %s92
      %s109 = sphi 0, %s93
      %s113 = sphi 0, %s113
      %s115 = sphi 0, %s113
      %s116 = sphi 0, %s115
      %s130 = sphi 0, %s116
      %s134 = sphi 0, %s134
      %s136 = sphi 0, %s134
      %s137 = sphi 0, %s136
      %s151 = sphi 0, %s137
      %s159 = sphi 0, %s161
      %s162 = sphi 0, %s159
      %s163 = sphi 0, %s162
      %s179 = sphi 0, %s163
    $region4: #{tpu_custom_call.1} parent=1 // loop_header_branch
      %21 = sbr.rel (%p19) target = $region8
    $region5: #{tpu_custom_call.1} parent=1 // loop_body
      %s23 = ssub.s32 %s18, 1
      %s24 = ssub.s32 %s18, 2
      %s31 = sadd.s32 1, %s26
      %p32 = scmp.ge.s32.totalorder %s31, 2
      %s33 = scalar_select %p32, 0, %s31
      %s34 = sadd.s32 1, %s25
      %s35 = scalar_select %p32, %s34, %s25
      %p36 = scmp.ge.s32.totalorder %s35, 1
      %s37 = scalar_select %p36, 0, %s35
      %s38 = ssub.s32 %s26, %s33
      %s39 = ssub.s32 %s25, %s37
      %s40 = sor.u32 %s38, %s39
      %p41 = scmp.eq.s32.totalorder %s40, 0
      %s43 = sadd.s32 %s42, 1
      %s44 = scalar_select %p41, %s42, %s43
      %p47 = pneg %p41
      %p48 = scmp.eq.s32.totalorder %s18, 1
      %p49 = por %p47, %p48
      %p50 = scmp.ne.s32.totalorder %s42, %s45
      %p51 = scmp.eq.s32.totalorder %s18, 0
      %p52 = por %p50, %p51
      %p53 = scmp.ne.s32.totalorder %s42, %s45
      %p54 = scmp.eq.s32.totalorder %s23, 1
      %p55 = por %p53, %p54
      %p56 = scmp.ne.s32.totalorder %s45, %s46
      %p57 = scmp.eq.s32.totalorder %s23, 0
      %p58 = por %p56, %p57
      %p59 = scmp.ne.s32.totalorder %s45, %s46
      %p60 = scmp.eq.s32.totalorder %s24, 1
      %p61 = por %p59, %p60
      %p63 = scmp.ne.s32.totalorder %s46, %s62
      %p64 = scmp.eq.s32.totalorder %s24, 0
      %p65 = por %p63, %p64
      %s67 = sadd.s32 %s66, 1
      %p70 = scmp.eq.s32.totalorder %s18, 1
      %p71 = scmp.ne.s32.totalorder %s66, %s68
      %p72 = scmp.eq.s32.totalorder %s18, 0
      %p73 = por %p71, %p72
      %p74 = scmp.ne.s32.totalorder %s66, %s68
      %p75 = scmp.eq.s32.totalorder %s23, 1
      %p76 = por %p74, %p75
      %p77 = scmp.ne.s32.totalorder %s68, %s69
      %p78 = scmp.eq.s32.totalorder %s23, 0
      %p79 = por %p77, %p78
      %p80 = scmp.ne.s32.totalorder %s68, %s69
      %p81 = scmp.eq.s32.totalorder %s24, 1
      %p82 = por %p80, %p81
      %p84 = scmp.ne.s32.totalorder %s69, %s83
      %p85 = scmp.eq.s32.totalorder %s24, 0
      %p86 = por %p84, %p85
      %s87 = ssub.s32 %s25, %s37
      %p88 = scmp.eq.s32.totalorder %s87, 0
      %s90 = sadd.s32 %s89, 1
      %s91 = scalar_select %p88, %s89, %s90
      %p94 = pneg %p88
      %p95 = scmp.eq.s32.totalorder %s18, 1
      %p96 = por %p94, %p95
      %p97 = scmp.ne.s32.totalorder %s89, %s92
      %p98 = scmp.eq.s32.totalorder %s18, 0
      %p99 = por %p97, %p98
      %p100 = scmp.ne.s32.totalorder %s89, %s92
      %p101 = scmp.eq.s32.totalorder %s23, 1
      %p102 = por %p100, %p101
      %p103 = scmp.ne.s32.totalorder %s92, %s93
      %p104 = scmp.eq.s32.totalorder %s23, 0
      %p105 = por %p103, %p104
      %p106 = scmp.ne.s32.totalorder %s92, %s93
      %p107 = scmp.eq.s32.totalorder %s24, 1
      %p108 = por %p106, %p107
      %p110 = scmp.ne.s32.totalorder %s93, %s109
      %p111 = scmp.eq.s32.totalorder %s24, 0
      %p112 = por %p110, %p111
      %s114 = sadd.s32 %s113, 1
      %p117 = scmp.eq.s32.totalorder %s18, 1
      %p118 = scmp.ne.s32.totalorder %s113, %s115
      %p119 = scmp.eq.s32.totalorder %s18, 0
      %p120 = por %p118, %p119
      %p121 = scmp.ne.s32.totalorder %s113, %s115
      %p122 = scmp.eq.s32.totalorder %s23, 1
      %p123 = por %p121, %p122
      %p124 = scmp.ne.s32.totalorder %s115, %s116
      %p125 = scmp.eq.s32.totalorder %s23, 0
      %p126 = por %p124, %p125
      %p127 = scmp.ne.s32.totalorder %s115, %s116
      %p128 = scmp.eq.s32.totalorder %s24, 1
      %p129 = por %p127, %p128
      %p131 = scmp.ne.s32.totalorder %s116, %s130
      %p132 = scmp.eq.s32.totalorder %s24, 0
      %p133 = por %p131, %p132
      %s135 = sadd.s32 %s134, 1
      %p138 = scmp.eq.s32.totalorder %s18, 1
      %p139 = scmp.ne.s32.totalorder %s134, %s136
      %p140 = scmp.eq.s32.totalorder %s18, 0
      %p141 = por %p139, %p140
      %p142 = scmp.ne.s32.totalorder %s134, %s136
      %p143 = scmp.eq.s32.totalorder %s23, 1
      %p144 = por %p142, %p143
      %p145 = scmp.ne.s32.totalorder %s136, %s137
      %p146 = scmp.eq.s32.totalorder %s23, 0
      %p147 = por %p145, %p146
      %p148 = scmp.ne.s32.totalorder %s136, %s137
      %p149 = scmp.eq.s32.totalorder %s24, 1
      %p150 = por %p148, %p149
      %p152 = scmp.ne.s32.totalorder %s137, %s151
      %p153 = scmp.eq.s32.totalorder %s24, 0
      %p154 = por %p152, %p153
      %s155 = ssub.s32 %s26, %s33
      %s156 = ssub.s32 %s25, %s37
      %s157 = sor.u32 %s155, %s156
      %p158 = scmp.eq.s32.totalorder %s157, 0
      %s160 = sadd.s32 %s159, 1
      %s161 = scalar_select %p158, %s159, %s160
      %p164 = pneg %p158
      %p165 = scmp.eq.s32.totalorder %s18, 1
      %p166 = por %p164, %p165
      %p167 = scmp.ne.s32.totalorder %s159, %s162
      %p168 = scmp.eq.s32.totalorder %s18, 0
      %p169 = por %p167, %p168
      %p170 = scmp.ne.s32.totalorder %s159, %s162
      %p171 = scmp.eq.s32.totalorder %s23, 1
      %p172 = por %p170, %p171
      %p173 = scmp.ne.s32.totalorder %s162, %s163
      %p174 = scmp.eq.s32.totalorder %s23, 0
      %p175 = por %p173, %p174
      %p176 = scmp.ne.s32.totalorder %s162, %s163
      %p177 = scmp.eq.s32.totalorder %s24, 1
      %p178 = por %p176, %p177
      %p180 = scmp.ne.s32.totalorder %s163, %s179
      %p181 = scmp.eq.s32.totalorder %s24, 0
      %p182 = por %p180, %p181
      %p183 = scmp.le.s32.totalorder 1, %s18
      %p184 = scmp.lt.s32.totalorder %s18, 3
      %p185 = pnand %p183, %p184
      %p186 = pneg %p185
      // Predicated region
      $region9: #{tpu_custom_call.1} parent=5 // pred_check
        _
      $region10: #{tpu_custom_call.1} parent=5 // pred_check_branch
        %188 = sbr.rel (%p185) target = $region12
      $region11: #{tpu_custom_call.1} parent=5 // pred_region
        %s189 = ssub.s32 %s18, 1
        // Predicated region
        $region13: #{tpu_custom_call.1} parent=11 // pred_check
          %p190 = pneg %p79
        $region14: #{tpu_custom_call.1} parent=11 // pred_check_branch
          %192 = sbr.rel (%p190) target = $region16
        $region15: #{tpu_custom_call.1} parent=11 // pred_region
          %s194 = ssub.s32 128, 128
          %195 = vsyncadd [#allocation6], %s194
          %s196 = sshll.u32 [#allocation5], 4
          %s197 = int_to_ptr.vmem [resolvable:$true] %s196
          %202 = dma.hbm_to_vmem [thread:$0]  %s1, 128, %s197, [#allocation6], 64, 64, 4
        $region16: #{tpu_custom_call.1} parent=11 // pred_fallthru
          _
        // Predicated region
        $region17: #{tpu_custom_call.1} parent=11 // pred_check
          %p203 = pneg %p105
        $region18: #{tpu_custom_call.1} parent=11 // pred_check_branch
          %205 = sbr.rel (%p203) target = $region20
        $region19: #{tpu_custom_call.1} parent=11 // pred_region
          %s207 = ssub.s32 128, 128
          %208 = vsyncadd [#allocation6], %s207
          %s209 = smul.addr %s27, 128
          %s210 = scalar_lea.hbm %s2, %s209
          %s212 = sshll.u32 [#allocation7], 4
          %s213 = int_to_ptr.vmem [resolvable:$true] %s212
          %215 = dma.hbm_to_vmem [thread:$0]  %s210, 128, %s213, [#allocation6]
        $region20: #{tpu_custom_call.1} parent=11 // pred_fallthru
          _
        // Predicated region
        $region21: #{tpu_custom_call.1} parent=11 // pred_check
          %p216 = pneg %p126
        $region22: #{tpu_custom_call.1} parent=11 // pred_check_branch
          %218 = sbr.rel (%p216) target = $region24
        $region23: #{tpu_custom_call.1} parent=11 // pred_region
          _
        $region24: #{tpu_custom_call.1} parent=11 // pred_fallthru
          _
        // Predicated region
        $region25: #{tpu_custom_call.1} parent=11 // pred_check
          %p219 = pneg %p147
        $region26: #{tpu_custom_call.1} parent=11 // pred_check_branch
          %221 = sbr.rel (%p219) target = $region28
        $region27: #{tpu_custom_call.1} parent=11 // pred_region
          _
        $region28: #{tpu_custom_call.1} parent=11 // pred_fallthru
          _
      $region12: #{tpu_custom_call.1} parent=5 // pred_fallthru
        _
      %p222 = scmp.lt.s32.totalorder %s18, 2
      // Predicated region
      $region29: #{tpu_custom_call.1} parent=5 // pred_check
        %p223 = pneg %p222
      $region30: #{tpu_custom_call.1} parent=5 // pred_check_branch
        %225 = sbr.rel (%p223) target = $region32
      $region31: #{tpu_custom_call.1} parent=5 // pred_region
        // Predicated region
        $region33: #{tpu_custom_call.1} parent=31 // pred_check
          %p226 = pneg %p52
        $region34: #{tpu_custom_call.1} parent=31 // pred_check_branch
          %228 = sbr.rel (%p226) target = $region36
        $region35: #{tpu_custom_call.1} parent=31 // pred_region
          %s229 = sand.u32 %s42, 1
          %s230 = scalar_lea.sflag [#allocation3], %s229
          %s231 = sand.u32 %s42, 1
          %s232 = smul.addr %s231, 4
          %s233 = scalar_lea.vmem [#allocation2], %s232
          %s235 = ssub.s32 64, 64
          %236 = vsyncadd %s230, %s235
          %s237 = sadd.s32 %s25, %s26
          %s238 = smul.addr %s237, 64
          %s239 = scalar_lea.hbm %s0, %s238
          %s241 = sshll.u32 %s233, 4
          %s242 = int_to_ptr.vmem [resolvable:$true] %s241
          %244 = dma.hbm_to_vmem [thread:$0]  %s239, 64, %s242, %s230
        $region36: #{tpu_custom_call.1} parent=31 // pred_fallthru
          _
      $region32: #{tpu_custom_call.1} parent=5 // pred_fallthru
        _
      %p245 = scmp.le.s32.totalorder 1, %s18
      %p246 = scmp.lt.s32.totalorder %s18, 3
      %p247 = pnand %p245, %p246
      %p248 = pneg %p247
      // Predicated region
      $region37: #{tpu_custom_call.1} parent=5 // pred_check
        _
      $region38: #{tpu_custom_call.1} parent=5 // pred_check_branch
        %250 = sbr.rel (%p247) target = $region40
      $region39: #{tpu_custom_call.1} parent=5 // pred_region
        %s251 = ssub.s32 %s18, 1
        %s252 = sand.u32 %s45, 1
        %s253 = scalar_lea.sflag [#allocation3], %s252
        %s254 = sand.u32 %s45, 1
        %s255 = smul.addr %s254, 4
        %s256 = scalar_lea.vmem [#allocation2], %s255
        // Predicated region
        $region41: #{tpu_custom_call.1} parent=39 // pred_check
          %p257 = pneg %p58
        $region42: #{tpu_custom_call.1} parent=39 // pred_check_branch
          %259 = sbr.rel (%p257) target = $region44
        $region43: #{tpu_custom_call.1} parent=39 // pred_region
          %260 = dma.done %s253, 64
        $region44: #{tpu_custom_call.1} parent=39 // pred_fallthru
          _
        // Predicated region
        $region45: #{tpu_custom_call.1} parent=39 // pred_check
          %p261 = pneg %p79
        $region46: #{tpu_custom_call.1} parent=39 // pred_check_branch
          %263 = sbr.rel (%p261) target = $region48
        $region47: #{tpu_custom_call.1} parent=39 // pred_region
          %264 = dma.done [#allocation6], 128
        $region48: #{tpu_custom_call.1} parent=39 // pred_fallthru
          _
        // Predicated region
        $region49: #{tpu_custom_call.1} parent=39 // pred_check
          %p265 = pneg %p105
        $region50: #{tpu_custom_call.1} parent=39 // pred_check_branch
          %267 = sbr.rel (%p265) target = $region52
        $region51: #{tpu_custom_call.1} parent=39 // pred_region
          %268 = dma.done [#allocation6], 128
        $region52: #{tpu_custom_call.1} parent=39 // pred_fallthru
          _
        %s269 = sand.u32 %s45, 1
        %s270 = scalar_lea.sflag [#allocation3], %s269
        %s271 = sand.u32 %s45, 1
        %s272 = smul.addr %s271, 4
        %s273 = scalar_lea.vmem [#allocation2], %s272
        %p274 = pneg %p58
        %p275 = pneg %p55
        %p276 = pneg %p79
        %p277 = pneg %p76
        %p278 = pneg %p105
        %p279 = pneg %p102
        %p280 = pneg %p126
        %p281 = pneg %p123
        %p282 = pneg %p147
        %p283 = pneg %p144
        %p284 = pneg %p175
        %p285 = pneg %p172
        %s286 = sand.u32 %s162, 1
        %s287 = scalar_lea.sflag [#allocation4], %s286
        %s288 = sand.u32 %s162, 1
        %s289 = smul.addr %s288, 8
        %s290 = scalar_lea.vmem [#allocation8], %s289
        %v292 = vld [vmem:[%s256] sm:$0xf]
        %v293 = vld [vmem:[#allocation5] sm:$0xf]
        %v294 = vld [vmem:[#allocation5 + $0x4] sm:$0xf]
        %v295 = vld [vmem:[#allocation7] sm:$0xff]
        %v298 = vunpack.c.l.b16 %v293
        %v299 = vunpack.c.l.b16 %v294
        %v300 = vpack.c.b16 %v299, %v298
        %vm302 = vcmask 130048
        %v304 = vsel %vm302, %v292, 0
        %306 = vmatprep.subr.bf16.mxu0 0
        %307 = vmatpush1.bf16.msra.mxu0 0
        %308 = vmatprep.subr.bf16.mxu0 0
        %309 = vmatpush1.bf16.msra.mxu0 0
        %310 = vmatprep.subr.bf16.mxu0 0
        %311 = vmatpush1.bf16.msra.mxu0 0
        %312 = vmatprep.subr.bf16.mxu0 0
        %313 = vmatpush1.bf16.msra.mxu0 0
        %314 = vmatprep.subr.bf16.mxu0 0
        %315 = vmatpush1.bf16.msra.mxu0 0
        %316 = vmatprep.subr.bf16.mxu0 0
        %317 = vmatpush1.bf16.msra.mxu0 0
        %318 = vmatprep.subr.bf16.mxu0 0
        %319 = vmatpush1.bf16.msra.mxu0 0
        %320 = vmatprep.subr.bf16.mxu0 0
        %321 = vmatpush1.bf16.msra.mxu0 %v300
        %322 = vmatprep.subr.bf16.mxu0 0
        %323 = vmatpush2.bf16.msra.mxu0 0
        %324 = vmatprep.subr.bf16.mxu0 0
        %325 = vmatpush2.bf16.msra.mxu0 0
        %326 = vmatprep.subr.bf16.mxu0 0
        %327 = vmatpush2.bf16.msra.mxu0 0
        %328 = vmatprep.subr.bf16.mxu0 0
        %329 = vmatpush2.bf16.msra.mxu0 0
        %330 = vmatprep.subr.bf16.mxu0 0
        %331 = vmatpush2.bf16.msra.mxu0 0
        %332 = vmatprep.subr.bf16.mxu0 0
        %333 = vmatpush2.bf16.msra.mxu0 0
        %334 = vmatprep.subr.bf16.mxu0 0
        %335 = vmatpush2.bf16.msra.mxu0 0
        %336 = vmatprep.subr.bf16.mxu0 0
        %337 = vmatpush2.bf16.msra.mxu0 0
        %338 = vmatprep.mubr.bf16.mxu0 0
        %339 = vmatmul.mubr.bf16.gmra.mxu0 %v304
        %v340 = vpop.f32.mrf.mxu0
        %v341 = vadd.f32 %v295, %v340
        %v342 = vpop.f32.mrf.mxu0
        %v343 = vpop.f32.mrf.mxu0
        %v344 = vpop.f32.mrf.mxu0
        %345 = vdwg.mxu0
        %346 = vadd.xlane.f32.xlu0 %v341
        %v347 = vpop.xlane.xlu0 %346
        %v348 = vmul.f32 %v347, 0.03125
        %v349 = vsub.f32 %v341, %v348
        %v350 = vlaneseq
        %v351 = vand.u32 %v350, 127
        %vm352 = vcmp.lt.s32.totalorder %v351, 32
        %v353 = vsel %vm352, %v349, 0.0
        %v354 = vmul.f32 %v353, %v353
        %355 = vadd.xlane.f32.xlu0 %v354
        %v356 = vpop.xlane.xlu0 %355
        %v357 = vmul.f32 %v356, 0.032258064
        %v358 = vrsqrt.pop %v357
        %v359 = vmul.f32 %v357, %v358
        %vm360 = vcmp.eq.f32.partialorder %v357, inf
        %v361 = vsel %vm360, %v357, %v359
        %vm362 = vcmp.eq.f32.partialorder %v357, 0.0
        %v363 = vand.u32 %v357, 2147483648
        %v364 = vsel %vm362, %v363, %v361
        %v365 = vadd.f32 %v364, 1e-06
        %v366 = vrcp.pop %v365
        %v367 = vld [vmem:[%s3] sm:$0x1]
        %v368 = vmul.f32 %v353, %v366
        %v370 = vlaneseq
        %v371 = vshrl.u32 %v370, 7
        %v372 = vsub.s32 0, %v371
        %v373 = vrot.slane %v367, %v372
        %v375 = vmul.f32 %v373, %v368
        %v376 = vld [vmem:[%s4] sm:$0x1]
        %v378 = vlaneseq
        %v379 = vshrl.u32 %v378, 7
        %v380 = vsub.s32 0, %v379
        %v381 = vrot.slane %v376, %v380
        %v383 = vadd.f32 %v375, %v381
        %384 = vst [vmem:[%s290] sm:$0xff] %v383
        %s385 = sand.u32 %s162, 1
        %s386 = scalar_lea.sflag [#allocation4], %s385
        %s387 = sand.u32 %s162, 1
        %s388 = smul.addr %s387, 8
        %s389 = scalar_lea.vmem [#allocation8], %s388
        // Predicated region
        $region53: #{tpu_custom_call.1} parent=39 // pred_check
          %p390 = pneg %p172
        $region54: #{tpu_custom_call.1} parent=39 // pred_check_branch
          %392 = sbr.rel (%p390) target = $region56
        $region55: #{tpu_custom_call.1} parent=39 // pred_region
          %s394 = ssub.s32 128, 128
          %395 = vsyncadd %s386, %s394
          %s396 = sadd.s32 %s27, %s28
          %s397 = smul.addr %s396, 128
          %s398 = scalar_lea.hbm %s5, %s397
          %s400 = sshll.u32 %s389, 4
          %s401 = int_to_ptr.vmem [resolvable:$true] %s400
          %403 = dma.vmem_to_hbm [thread:$0]  %s401, 128, %s398, %s386
        $region56: #{tpu_custom_call.1} parent=39 // pred_fallthru
          _
      $region40: #{tpu_custom_call.1} parent=5 // pred_fallthru
        _
      %p404 = scmp.le.s32.totalorder 2, %s18
      // Predicated region
      $region57: #{tpu_custom_call.1} parent=5 // pred_check
        %p405 = pneg %p404
      $region58: #{tpu_custom_call.1} parent=5 // pred_check_branch
        %407 = sbr.rel (%p405) target = $region60
      $region59: #{tpu_custom_call.1} parent=5 // pred_region
        %s408 = ssub.s32 %s18, 2
        // Predicated region
        $region61: #{tpu_custom_call.1} parent=59 // pred_check
          %p409 = pneg %p178
        $region62: #{tpu_custom_call.1} parent=59 // pred_check_branch
          %411 = sbr.rel (%p409) target = $region64
        $region63: #{tpu_custom_call.1} parent=59 // pred_region
          %s412 = sand.u32 %s163, 1
          %s413 = scalar_lea.sflag [#allocation4], %s412
          %s414 = sand.u32 %s163, 1
          %s415 = smul.addr %s414, 8
          %s416 = scalar_lea.vmem [#allocation8], %s415
          %417 = dma.done %s413, 128
        $region64: #{tpu_custom_call.1} parent=59 // pred_fallthru
          _
      $region60: #{tpu_custom_call.1} parent=5 // pred_fallthru
        _
    $region6: #{tpu_custom_call.1} parent=1 // loop_footer
      %s22 = sadd.s32 1, %s18
    $region7: #{tpu_custom_call.1} parent=1 // loop_footer_branch
      %17 = sbr.rel target = $region3
    $region8: #{tpu_custom_call.1} parent=1 // loop_exit
      _
    %418 = vsyncpa [#allocation3], 1
    %s419 = scalar_lea.sflag [#allocation3], 1
    %420 = vsyncpa %s419, 1
    %421 = vsyncpa [#allocation6], 1
    %422 = vsyncpa [#allocation4], 1
    %s423 = scalar_lea.sflag [#allocation4], 1
    %424 = vsyncpa %s423, 1

</llo_original>
